<compile_context>
chip_gen: v7x
topology: tpu7x:2x2x1
jax: 0.10.0
libtpu: 0.0.40
codegen_flags: <defaults>
</compile_context>

<pallas_src>
import functools

import jax
import jax.numpy as jnp
from jax.experimental import pallas as pl
from jax.experimental.pallas import tpu as pltpu


_LANE = 128          # vreg lane width
_MAX_TILE_B = 256    # keeps the live (TILE_B x 128) f32 intermediate ~32 vregs


def _round_up(n, m):
    return ((n + m - 1) // m) * m


def _mlp_kernel(n_layers, last_on_vpu, use_bf16, *refs):
    # refs = (x_ref, w0, b0, w1, b1, ..., w_{L-1}, b_{L-1}, out_ref)
    x_ref = refs[0]
    out_ref = refs[-1]
    wb = refs[1:-1]
    assert len(wb) == 2 * n_layers

    def matmul(h, w):
        if use_bf16:
            # bf16 operands, f32 accumulation (v6e/v7x MXU peak path).
            return jnp.dot(h.astype(jnp.bfloat16), w.astype(jnp.bfloat16),
                           preferred_element_type=jnp.float32)
        return jnp.dot(h, w, preferred_element_type=jnp.float32)

    h = x_ref[...].astype(jnp.float32)

    # Hidden layers: MXU matmul (lane-dense padded widths) + f32 tanh on VPU/EUP.
    for i in range(n_layers - 1):
        w = wb[2 * i][...]
        b = wb[2 * i + 1][...]
        h = matmul(h, w.astype(jnp.float32) if not use_bf16 else w) + b
        h = jnp.tanh(h)  # keep tanh in f32 (v5e EUP has no bf16)

    w_last = wb[-2][...]
    b_last = wb[-1][...]
    if last_on_vpu:
        # Final layer has output width 1: VPU broadcast-multiply + XLU lane
        # reduction avoids an N=1 MXU matmul. w_last is stored as a (1, h_pad) row.
        y = jnp.sum(h * w_last, axis=-1, keepdims=True) + b_last
    else:
        y = matmul(h, w_last) + b_last
    out_ref[...] = y.astype(out_ref.dtype)


def _prepare_padded_params(weights, biases):
    """Zero-pad hidden widths up to multiples of 128 lanes (wrapper-side, once)."""
    n = len(weights)
    padded_w, padded_b = [], []
    prev_out = weights[0].shape[0]  # true input size (contraction dim of layer 0)
    for i, (w, b) in enumerate(zip(weights, biases)):
        fan_in, fan_out = w.shape
        in_pad = prev_out
        out_pad = _round_up(fan_out, _LANE) if i < n - 1 else fan_out
        wp = jnp.zeros((in_pad, out_pad), jnp.float32).at[:fan_in, :fan_out].set(w)
        bp = jnp.zeros((1, out_pad), jnp.float32).at[0, :fan_out].set(b)
        padded_w.append(wp)
        padded_b.append(bp)
        prev_out = out_pad
    return padded_w, padded_b


def mlp_forward(x, weights, biases, use_bf16_matmul=False):
    """Fused MLP forward in a single batch-tiled Pallas kernel.

    x:       (batch, input_size) float32
    weights: list of (in_i, out_i) float32 arrays (already transposed from torch layout)
    biases:  list of (out_i,) float32 arrays
    """
    n_layers = len(weights)
    batch, in_dim = x.shape
    out_dim = weights[-1].shape[1]

    padded_w, padded_b = _prepare_padded_params(weights, biases)

    # Final (hidden -> out) layer on the VPU when out width is 1.
    last_on_vpu = (out_dim == 1) and (n_layers >= 1)
    if last_on_vpu:
        padded_w[-1] = padded_w[-1].T  # (1, h_pad) row for broadcast multiply

    # Batch tiling: largest tile <= _MAX_TILE_B, multiple of 8 sublanes.
    tile_b = min(_MAX_TILE_B, _round_up(batch, 8))
    batch_pad = _round_up(batch, tile_b)
    if batch_pad != batch:
        x_in = jnp.zeros((batch_pad, in_dim), x.dtype).at[:batch].set(x)
    else:
        x_in = x
    num_tiles = batch_pad // tile_b

    operands = [x_in]
    in_specs = [pl.BlockSpec((tile_b, in_dim), lambda i: (i, 0))]
    for w, b in zip(padded_w, padded_b):
        operands.append(w)
        operands.append(b)
        # Constant index_map -> weights/biases stay resident in VMEM across grid steps.
        in_specs.append(pl.BlockSpec(w.shape, lambda i: (0, 0)))
        in_specs.append(pl.BlockSpec(b.shape, lambda i: (0, 0)))
    out_specs = pl.BlockSpec((tile_b, out_dim), lambda i: (i, 0))

    # Advisory cost estimate for XLA scheduling around the custom call.
    flops = 2 * batch_pad * sum(int(w.shape[0]) * int(w.shape[1]) for w in padded_w)
    transcendentals = batch_pad * sum(int(w.shape[1]) for w in padded_w[:-1])
    bytes_accessed = (
        x_in.size * x_in.dtype.itemsize
        + sum(int(a.size) * a.dtype.itemsize for a in operands[1:])
        + batch_pad * out_dim * 4
    )
    cost = pl.CostEstimate(flops=flops, transcendentals=transcendentals,
                           bytes_accessed=bytes_accessed)

    kernel = functools.partial(_mlp_kernel, n_layers, last_on_vpu, use_bf16_matmul)

    y_pad = pl.pallas_call(
        kernel,
        out_shape=jax.ShapeDtypeStruct((batch_pad, out_dim), jnp.float32),
        grid_spec=pltpu.PrefetchScalarGridSpec(
            num_scalar_prefetch=0,
            grid=(num_tiles,),
            in_specs=in_specs,
            out_specs=out_specs,
        ),
        compiler_params=pltpu.CompilerParams(
            dimension_semantics=("parallel",),   # use both TCs on v7x; no-op on v5e/v6e
            vmem_limit_bytes=32 * 1024 * 1024,   # sized for v7x's smaller VMEM too
        ),
        cost_estimate=cost,
    )(*operands)

    return y_pad[:batch]


def init_params(key, input_size, hidden_layer_sizes, output_size):
    """Deterministic init mimicking nn.Linear default (uniform +-1/sqrt(fan_in))."""
    sizes = [input_size] + list(hidden_layer_sizes) + [output_size]
    weights, biases = [], []
    for i in range(len(sizes) - 1):
        fan_in, fan_out = sizes[i], sizes[i + 1]
        key, kw, kb = jax.random.split(key, 3)
        bound = 1.0 / (fan_in ** 0.5)
        # Stored directly in (in, out) layout for the kernel.
        w = jax.random.uniform(kw, (fan_in, fan_out), jnp.float32, -bound, bound)
        b = jax.random.uniform(kb, (fan_out,), jnp.float32, -bound, bound)
        weights.append(w)
        biases.append(b)
    return weights, biases


def reference_forward(x, weights, biases):
    h = x
    n = len(weights)
    for i, (w, b) in enumerate(zip(weights, biases)):
        h = h @ w + b
        if i < n - 1:
            h = jnp.tanh(h)
    return h


if __name__ == "__main__":
    key = jax.random.PRNGKey(0)

    input_size = 4
    hidden_layer_sizes = [32, 16]
    output_size = 1

    key, kp = jax.random.split(key)
    weights, biases = init_params(kp, input_size, hidden_layer_sizes, output_size)

    # Small batch (single grid step).
    key, kx = jax.random.split(key)
    x_small = jax.random.normal(kx, (8, input_size), dtype=jnp.float32)
    y_small = jax.block_until_ready(mlp_forward(x_small, weights, biases))
    y_small_ref = reference_forward(x_small, weights, biases)
    assert y_small.shape == (8, output_size)
    assert jnp.allclose(y_small, y_small_ref, atol=1e-5, rtol=1e-5)

    # Larger, non-multiple batch (exercises batch padding + multi-step grid).
    key, kx2 = jax.random.split(key)
    x_big = jax.random.normal(kx2, (300, input_size), dtype=jnp.float32)
    y_big = jax.block_until_ready(mlp_forward(x_big, weights, biases))
    y_big_ref = reference_forward(x_big, weights, biases)
    assert y_big.shape == (300, output_size)
    assert jnp.allclose(y_big, y_big_ref, atol=1e-5, rtol=1e-5)

    print("KERNEL_OK")
</pallas_src>

<mosaic_0001>
module attributes {stable_mosaic.version = 11 : i64} {
  func.func @_mlp_kernel(%arg0: i32, %arg1: memref<8x4xf32, #tpu.memory_space<vmem>>, %arg2: memref<4x128xf32, #tpu.memory_space<vmem>>, %arg3: memref<1x128xf32, #tpu.memory_space<vmem>>, %arg4: memref<128x128xf32, #tpu.memory_space<vmem>>, %arg5: memref<1x128xf32, #tpu.memory_space<vmem>>, %arg6: memref<1x128xf32, #tpu.memory_space<vmem>>, %arg7: memref<1x1xf32, #tpu.memory_space<vmem>>, %arg8: memref<8x1xf32, #tpu.memory_space<vmem>>) attributes {dimension_semantics = [#tpu.dimension_semantics<parallel>], iteration_bounds = array<i64: 1>, scalar_prefetch = 0 : i64, scratch_operands = 0 : i64, tpu.core_type = #tpu.core_type<tc>, window_params = [{transform_indices = @transform_0, window_bounds = array<i64: 8, 4>}, {pipeline_mode = #tpu.pipeline_mode<synchronous>, transform_indices = @transform_1, window_bounds = array<i64: 4, 128>}, {pipeline_mode = #tpu.pipeline_mode<synchronous>, transform_indices = @transform_2, window_bounds = array<i64: 1, 128>}, {pipeline_mode = #tpu.pipeline_mode<synchronous>, transform_indices = @transform_3, window_bounds = array<i64: 128, 128>}, {pipeline_mode = #tpu.pipeline_mode<synchronous>, transform_indices = @transform_4, window_bounds = array<i64: 1, 128>}, {pipeline_mode = #tpu.pipeline_mode<synchronous>, transform_indices = @transform_5, window_bounds = array<i64: 1, 128>}, {pipeline_mode = #tpu.pipeline_mode<synchronous>, transform_indices = @transform_6, window_bounds = array<i64: 1, 1>}, {transform_indices = @transform_7, window_bounds = array<i64: 8, 1>}]} {
    %c0 = arith.constant 0 : index
    %c0_0 = arith.constant 0 : index
    %0 = vector.load %arg1[%c0, %c0_0] : memref<8x4xf32, #tpu.memory_space<vmem>>, vector<8x4xf32>
    %c0_1 = arith.constant 0 : index
    %c0_2 = arith.constant 0 : index
    %1 = vector.load %arg2[%c0_1, %c0_2] : memref<4x128xf32, #tpu.memory_space<vmem>>, vector<4x128xf32>
    %c0_3 = arith.constant 0 : index
    %c0_4 = arith.constant 0 : index
    %2 = vector.load %arg3[%c0_3, %c0_4] : memref<1x128xf32, #tpu.memory_space<vmem>>, vector<1x128xf32>
    %cst = arith.constant dense<0.000000e+00> : vector<8x128xf32>
    %3 = tpu.matmul %0, %1, %cst {dimension_numbers = #tpu.dot_dimension_numbers<[1], [0], [0], [1], [0, 0, 1, 1], [], []>} : vector<8x4xf32>, vector<4x128xf32>, vector<8x128xf32> -> vector<8x128xf32>
    %4 = vector.broadcast %2 : vector<1x128xf32> to vector<8x128xf32>
    %5 = arith.addf %3, %4 : vector<8x128xf32>
    %6 = math.tanh %5 : vector<8x128xf32>
    %c0_5 = arith.constant 0 : index
    %c0_6 = arith.constant 0 : index
    %7 = vector.load %arg4[%c0_5, %c0_6] : memref<128x128xf32, #tpu.memory_space<vmem>>, vector<128x128xf32>
    %c0_7 = arith.constant 0 : index
    %c0_8 = arith.constant 0 : index
    %8 = vector.load %arg5[%c0_7, %c0_8] : memref<1x128xf32, #tpu.memory_space<vmem>>, vector<1x128xf32>
    %cst_9 = arith.constant dense<0.000000e+00> : vector<8x128xf32>
    %9 = tpu.matmul %6, %7, %cst_9 {dimension_numbers = #tpu.dot_dimension_numbers<[1], [0], [0], [1], [0, 0, 1, 1], [], []>} : vector<8x128xf32>, vector<128x128xf32>, vector<8x128xf32> -> vector<8x128xf32>
    %10 = vector.broadcast %8 : vector<1x128xf32> to vector<8x128xf32>
    %11 = arith.addf %9, %10 : vector<8x128xf32>
    %12 = math.tanh %11 : vector<8x128xf32>
    %c0_10 = arith.constant 0 : index
    %c0_11 = arith.constant 0 : index
    %13 = vector.load %arg6[%c0_10, %c0_11] : memref<1x128xf32, #tpu.memory_space<vmem>>, vector<1x128xf32>
    %c0_12 = arith.constant 0 : index
    %c0_13 = arith.constant 0 : index
    %14 = vector.load %arg7[%c0_12, %c0_13] : memref<1x1xf32, #tpu.memory_space<vmem>>, vector<1x1xf32>
    %15 = vector.broadcast %13 : vector<1x128xf32> to vector<8x128xf32>
    %16 = arith.mulf %12, %15 : vector<8x128xf32>
    %cst_14 = arith.constant dense<0.000000e+00> : vector<8xf32>
    %17 = vector.multi_reduction <add>, %16, %cst_14 [1] : vector<8x128xf32> to vector<8xf32>
    %18 = vector.shape_cast %17 : vector<8xf32> to vector<8x1xf32>
    %19 = vector.broadcast %14 : vector<1x1xf32> to vector<8x1xf32>
    %20 = arith.addf %18, %19 : vector<8x1xf32>
    %c0_15 = arith.constant 0 : index
    %c0_16 = arith.constant 0 : index
    %21 = vector.load %arg8[%c0_15, %c0_16] : memref<8x1xf32, #tpu.memory_space<vmem>>, vector<8x1xf32>
    tpu.vector_store %arg8[%c0_15, %c0_16], %20 {strides = array<i32>} : memref<8x1xf32, #tpu.memory_space<vmem>>, vector<8x1xf32>,
    return
  }
  func.func @transform_0(%arg0: i32) -> (i32, i32) {
    %c0_i32 = arith.constant 0 : i32
    %c0_i32_0 = arith.constant 0 : i32
    return %arg0, %c0_i32 : i32, i32
  }
  func.func @transform_1(%arg0: i32) -> (i32, i32) {
    %c0_i32 = arith.constant 0 : i32
    %c0_i32_0 = arith.constant 0 : i32
    %c0_i32_1 = arith.constant 0 : i32
    return %c0_i32, %c0_i32_0 : i32, i32
  }
  func.func @transform_2(%arg0: i32) -> (i32, i32) {
    %c0_i32 = arith.constant 0 : i32
    %c0_i32_0 = arith.constant 0 : i32
    %c0_i32_1 = arith.constant 0 : i32
    return %c0_i32, %c0_i32_0 : i32, i32
  }
  func.func @transform_3(%arg0: i32) -> (i32, i32) {
    %c0_i32 = arith.constant 0 : i32
    %c0_i32_0 = arith.constant 0 : i32
    %c0_i32_1 = arith.constant 0 : i32
    return %c0_i32, %c0_i32_0 : i32, i32
  }
  func.func @transform_4(%arg0: i32) -> (i32, i32) {
    %c0_i32 = arith.constant 0 : i32
    %c0_i32_0 = arith.constant 0 : i32
    %c0_i32_1 = arith.constant 0 : i32
    return %c0_i32, %c0_i32_0 : i32, i32
  }
  func.func @transform_5(%arg0: i32) -> (i32, i32) {
    %c0_i32 = arith.constant 0 : i32
    %c0_i32_0 = arith.constant 0 : i32
    %c0_i32_1 = arith.constant 0 : i32
    return %c0_i32, %c0_i32_0 : i32, i32
  }
  func.func @transform_6(%arg0: i32) -> (i32, i32) {
    %c0_i32 = arith.constant 0 : i32
    %c0_i32_0 = arith.constant 0 : i32
    %c0_i32_1 = arith.constant 0 : i32
    return %c0_i32, %c0_i32_0 : i32, i32
  }
  func.func @transform_7(%arg0: i32) -> (i32, i32) {
    %c0_i32 = arith.constant 0 : i32
    %c0_i32_0 = arith.constant 0 : i32
    return %arg0, %c0_i32 : i32, i32
  }
}

</mosaic_0001>

<llo_original>
// kernel: tpu_custom_call.1
$region0: #{tpu_custom_call.1}
  #allocation0 [shape = 'u32[]', space=smem, size = 0x4, offset = 0x4, fixed_abs, tag = 'smem constant byte address 0x4 - core index']
  #allocation1 [shape = 'u32[144,128]{1,0:T(1,128)}', space=vmem, size = 0x12000, scoped, tag = 'internal scratch']
  #allocation2 [shape = 'f32[1,1]{1,0:T(1,128)S(1)}', space=vmem, size = 0x200, scoped, tag = 'scoped memory for tpu_custom_call.1']
  %s0 = inlined_call_operand.vmem [shape: f32[8,4], index: 0, kind: input, shape index: {}]
  %s1 = inlined_call_operand.vmem [shape: f32[4,128], index: 1, kind: input, shape index: {}]
  %s2 = inlined_call_operand.vmem [shape: f32[1,128], index: 2, kind: input, shape index: {}]
  %s3 = inlined_call_operand.hbm [shape: f32[128,128], index: 3, kind: input, shape index: {}]
  %s4 = inlined_call_operand.vmem [shape: f32[1,128], index: 4, kind: input, shape index: {}]
  %s5 = inlined_call_operand.vmem [shape: f32[1,128], index: 5, kind: input, shape index: {}]
  %s6 = inlined_call_operand.<no memory space> [shape: f32[1,1], index: 6, kind: input, shape index: {}]
  %s7 = inlined_call_operand.vmem [shape: f32[8,1], index: 7, kind: output, shape index: {}]
  %s8 = sld [smem:[#allocation0]]
  $region42: #{tpu_custom_call.1} parent=0
    _
  %s10 = ssub.s32 1, %s8
  %s11 = scalar_select 0, %s10, %s8
  %v12 = vstv %s6
  %13 = vst [vmem:[#allocation2] sm:$0x1] %v12
  $region1: #{tpu_custom_call.1} parent=0
    #allocation3 [shape = 'u8[65536]{0}', space=vmem, size = 0x10000, scoped, tag = 'input window, operand 3, single buffered']
    #allocation4 [shape = 's32[1]{0}', space=sflag, size = 0x4, scoped, tag = 'scoped memory for tpu_custom_call.1']
    %14 = vsyncpa [#allocation4], 0
    // Predicated region
    $region2: #{tpu_custom_call.1} parent=1 // pred_check
      _
    $region3: #{tpu_custom_call.1} parent=1 // pred_check_branch
      %16 = sbr.rel (0) target = $region5
    $region4: #{tpu_custom_call.1} parent=1 // pred_region
      _
    $region5: #{tpu_custom_call.1} parent=1 // pred_fallthru
      _
    // Predicated region
    $region6: #{tpu_custom_call.1} parent=1 // pred_check
      _
    $region7: #{tpu_custom_call.1} parent=1 // pred_check_branch
      %18 = sbr.rel (0) target = $region9
    $region8: #{tpu_custom_call.1} parent=1 // pred_region
      _
    $region9: #{tpu_custom_call.1} parent=1 // pred_fallthru
      _
    // Predicated region
    $region10: #{tpu_custom_call.1} parent=1 // pred_check
      _
    $region11: #{tpu_custom_call.1} parent=1 // pred_check_branch
      %20 = sbr.rel (0) target = $region13
    $region12: #{tpu_custom_call.1} parent=1 // pred_region
      _
    $region13: #{tpu_custom_call.1} parent=1 // pred_fallthru
      _
    // Predicated region
    $region14: #{tpu_custom_call.1} parent=1 // pred_check
      _
    $region15: #{tpu_custom_call.1} parent=1 // pred_check_branch
      %22 = sbr.rel (0) target = $region17
    $region16: #{tpu_custom_call.1} parent=1 // pred_region
      %s24 = ssub.s32 2048, 2048
      %25 = vsyncadd [#allocation4], %s24
      %s26 = sshll.u32 [#allocation3], 4
      %s27 = int_to_ptr.vmem [resolvable:$true] %s26
      %32 = dma.hbm_to_vmem [thread:$0]  %s3, 2048, %s27, [#allocation4], 128, 128, 8
    $region17: #{tpu_custom_call.1} parent=1 // pred_fallthru
      _
    // Predicated region
    $region18: #{tpu_custom_call.1} parent=1 // pred_check
      _
    $region19: #{tpu_custom_call.1} parent=1 // pred_check_branch
      %34 = sbr.rel (0) target = $region21
    $region20: #{tpu_custom_call.1} parent=1 // pred_region
      _
    $region21: #{tpu_custom_call.1} parent=1 // pred_fallthru
      _
    // Predicated region
    $region22: #{tpu_custom_call.1} parent=1 // pred_check
      _
    $region23: #{tpu_custom_call.1} parent=1 // pred_check_branch
      %36 = sbr.rel (0) target = $region25
    $region24: #{tpu_custom_call.1} parent=1 // pred_region
      _
    $region25: #{tpu_custom_call.1} parent=1 // pred_fallthru
      _
    // Predicated region
    $region26: #{tpu_custom_call.1} parent=1 // pred_check
      _
    $region27: #{tpu_custom_call.1} parent=1 // pred_check_branch
      %38 = sbr.rel (0) target = $region29
    $region28: #{tpu_custom_call.1} parent=1 // pred_region
      _
    $region29: #{tpu_custom_call.1} parent=1 // pred_fallthru
      _
    // Predicated region
    $region30: #{tpu_custom_call.1} parent=1 // pred_check
      _
    $region31: #{tpu_custom_call.1} parent=1 // pred_check_branch
      %40 = sbr.rel (0) target = $region33
    $region32: #{tpu_custom_call.1} parent=1 // pred_region
      %41 = dma.done [#allocation4], 2048
    $region33: #{tpu_custom_call.1} parent=1 // pred_fallthru
      _
    %v42 = vld [vmem:[%s0] sm:$0xff]
    %v43 = vld [vmem:[%s1] sm:$0xf]
    %v44 = vld [vmem:[%s2] sm:$0x1]
    %v46 = vlaneseq
    %v47 = vshrl.u32 %v46, 7
    %v48 = vsub.s32 0, %v47
    %v49 = vrot.slane %v44, %v48
    %vm51 = vcmask 31744
    %v53 = vsel %vm51, %v42, 0
    %vm55 = vcmask 1043456
    %v57 = vsel %vm55, %v43, 0
    %59 = vmatprep.subr.mxu0 0.0
    %60 = vmatpush1.msra.mxu0 %v57
    %61 = vmatprep.subr.mxu0 0.0
    %62 = vmatpush1.msra.mxu0 0.0
    %63 = vmatprep.subr.mxu0 0.0
    %64 = vmatpush1.msra.mxu0 0.0
    %65 = vmatprep.subr.mxu0 0.0
    %66 = vmatpush1.msra.mxu0 0.0
    %67 = vmatprep.subr.mxu0 0.0
    %68 = vmatpush1.msra.mxu0 0.0
    %69 = vmatprep.subr.mxu0 0.0
    %70 = vmatpush1.msra.mxu0 0.0
    %71 = vmatprep.subr.mxu0 0.0
    %72 = vmatpush1.msra.mxu0 0.0
    %73 = vmatprep.subr.mxu0 0.0
    %74 = vmatpush1.msra.mxu0 0.0
    %75 = vmatprep.subr.mxu0 0.0
    %76 = vmatpush1.msra.mxu0 0.0
    %77 = vmatprep.subr.mxu0 0.0
    %78 = vmatpush1.msra.mxu0 0.0
    %79 = vmatprep.subr.mxu0 0.0
    %80 = vmatpush1.msra.mxu0 0.0
    %81 = vmatprep.subr.mxu0 0.0
    %82 = vmatpush1.msra.mxu0 0.0
    %83 = vmatprep.subr.mxu0 0.0
    %84 = vmatpush1.msra.mxu0 0.0
    %85 = vmatprep.subr.mxu0 0.0
    %86 = vmatpush1.msra.mxu0 0.0
    %87 = vmatprep.subr.mxu0 0.0
    %88 = vmatpush1.msra.mxu0 0.0
    %89 = vmatprep.subr.mxu0 0.0
    %90 = vmatpush1.msra.mxu0 0.0
    %91 = vmatprep.subr.mxu0 0.0
    %92 = vmatpush1.msra.mxu0 0.0
    %93 = vmatprep.subr.mxu0 0.0
    %94 = vmatpush1.msra.mxu0 0.0
    %95 = vmatprep.subr.mxu0 0.0
    %96 = vmatpush1.msra.mxu0 0.0
    %97 = vmatprep.subr.mxu0 0.0
    %98 = vmatpush1.msra.mxu0 0.0
    %99 = vmatprep.subr.mxu0 0.0
    %100 = vmatpush1.msra.mxu0 0.0
    %101 = vmatprep.subr.mxu0 0.0
    %102 = vmatpush1.msra.mxu0 0.0
    %103 = vmatprep.subr.mxu0 0.0
    %104 = vmatpush1.msra.mxu0 0.0
    %105 = vmatprep.subr.mxu0 0.0
    %106 = vmatpush1.msra.mxu0 0.0
    %107 = vmatprep.subr.mxu0 0.0
    %108 = vmatpush1.msra.mxu0 0.0
    %109 = vmatprep.subr.mxu0 0.0
    %110 = vmatpush1.msra.mxu0 0.0
    %111 = vmatprep.subr.mxu0 0.0
    %112 = vmatpush1.msra.mxu0 0.0
    %113 = vmatprep.subr.mxu0 0.0
    %114 = vmatpush1.msra.mxu0 0.0
    %115 = vmatprep.subr.mxu0 0.0
    %116 = vmatpush1.msra.mxu0 0.0
    %117 = vmatprep.subr.mxu0 0.0
    %118 = vmatpush1.msra.mxu0 0.0
    %119 = vmatprep.subr.mxu0 0.0
    %120 = vmatpush1.msra.mxu0 0.0
    %121 = vmatprep.subr.mxu0 0.0
    %122 = vmatpush1.msra.mxu0 0.0
    %123 = vmatprep.mubr.f32.mxu0 0.0
    %124 = vmatmul.mubr.f32.gmra.mrb[0].mxu0 %v53
    %v125 = vpop.f32.mrb[0].mxu0
    %v126 = vadd.f32 %v49, %v125
    %v127 = vpop.f32.mrb[0].mxu0
    %128 = vdwg.mxu0
    %v129 = vtanh.pop %v126
    %v130 = vld [vmem:[#allocation3] sm:$0xff]
    %v131 = vld [vmem:[#allocation3 + $0x8] sm:$0xff]
    %v132 = vld [vmem:[#allocation3 + $0x10] sm:$0xff]
    %v133 = vld [vmem:[#allocation3 + $0x18] sm:$0xff]
    %v134 = vld [vmem:[#allocation3 + $0x20] sm:$0xff]
    %v135 = vld [vmem:[#allocation3 + $0x28] sm:$0xff]
    %v136 = vld [vmem:[#allocation3 + $0x30] sm:$0xff]
    %v137 = vld [vmem:[#allocation3 + $0x38] sm:$0xff]
    %v138 = vld [vmem:[#allocation3 + $0x40] sm:$0xff]
    %v139 = vld [vmem:[#allocation3 + $0x48] sm:$0xff]
    %v140 = vld [vmem:[#allocation3 + $0x50] sm:$0xff]
    %v141 = vld [vmem:[#allocation3 + $0x58] sm:$0xff]
    %v142 = vld [vmem:[#allocation3 + $0x60] sm:$0xff]
    %v143 = vld [vmem:[#allocation3 + $0x68] sm:$0xff]
    %v144 = vld [vmem:[#allocation3 + $0x70] sm:$0xff]
    %v145 = vld [vmem:[#allocation3 + $0x78] sm:$0xff]
    %v146 = vld [vmem:[%s4] sm:$0x1]
    %v148 = vlaneseq
    %v149 = vshrl.u32 %v148, 7
    %v150 = vsub.s32 0, %v149
    %v151 = vrot.slane %v146, %v150
    %153 = vmatprep.subr.mxu0 0.0
    %154 = vmatpush1.msra.mxu0 %v130
    %155 = vmatprep.subr.mxu0 0.0
    %156 = vmatpush1.msra.mxu0 %v131
    %157 = vmatprep.subr.mxu0 0.0
    %158 = vmatpush1.msra.mxu0 %v132
    %159 = vmatprep.subr.mxu0 0.0
    %160 = vmatpush1.msra.mxu0 %v133
    %161 = vmatprep.subr.mxu0 0.0
    %162 = vmatpush1.msra.mxu0 %v134
    %163 = vmatprep.subr.mxu0 0.0
    %164 = vmatpush1.msra.mxu0 %v135
    %165 = vmatprep.subr.mxu0 0.0
    %166 = vmatpush1.msra.mxu0 %v136
    %167 = vmatprep.subr.mxu0 0.0
    %168 = vmatpush1.msra.mxu0 %v137
    %169 = vmatprep.subr.mxu0 0.0
    %170 = vmatpush1.msra.mxu0 %v138
    %171 = vmatprep.subr.mxu0 0.0
    %172 = vmatpush1.msra.mxu0 %v139
    %173 = vmatprep.subr.mxu0 0.0
    %174 = vmatpush1.msra.mxu0 %v140
    %175 = vmatprep.subr.mxu0 0.0
    %176 = vmatpush1.msra.mxu0 %v141
    %177 = vmatprep.subr.mxu0 0.0
    %178 = vmatpush1.msra.mxu0 %v142
    %179 = vmatprep.subr.mxu0 0.0
    %180 = vmatpush1.msra.mxu0 %v143
    %181 = vmatprep.subr.mxu0 0.0
    %182 = vmatpush1.msra.mxu0 %v144
    %183 = vmatprep.subr.mxu0 0.0
    %184 = vmatpush1.msra.mxu0 %v145
    %185 = vmatprep.subr.mxu0 0.0
    %186 = vmatpush1.msra.mxu0 0.0
    %187 = vmatprep.subr.mxu0 0.0
    %188 = vmatpush1.msra.mxu0 0.0
    %189 = vmatprep.subr.mxu0 0.0
    %190 = vmatpush1.msra.mxu0 0.0
    %191 = vmatprep.subr.mxu0 0.0
    %192 = vmatpush1.msra.mxu0 0.0
    %193 = vmatprep.subr.mxu0 0.0
    %194 = vmatpush1.msra.mxu0 0.0
    %195 = vmatprep.subr.mxu0 0.0
    %196 = vmatpush1.msra.mxu0 0.0
    %197 = vmatprep.subr.mxu0 0.0
    %198 = vmatpush1.msra.mxu0 0.0
    %199 = vmatprep.subr.mxu0 0.0
    %200 = vmatpush1.msra.mxu0 0.0
    %201 = vmatprep.subr.mxu0 0.0
    %202 = vmatpush1.msra.mxu0 0.0
    %203 = vmatprep.subr.mxu0 0.0
    %204 = vmatpush1.msra.mxu0 0.0
    %205 = vmatprep.subr.mxu0 0.0
    %206 = vmatpush1.msra.mxu0 0.0
    %207 = vmatprep.subr.mxu0 0.0
    %208 = vmatpush1.msra.mxu0 0.0
    %209 = vmatprep.subr.mxu0 0.0
    %210 = vmatpush1.msra.mxu0 0.0
    %211 = vmatprep.subr.mxu0 0.0
    %212 = vmatpush1.msra.mxu0 0.0
    %213 = vmatprep.subr.mxu0 0.0
    %214 = vmatpush1.msra.mxu0 0.0
    %215 = vmatprep.subr.mxu0 0.0
    %216 = vmatpush1.msra.mxu0 0.0
    %217 = vmatprep.mubr.f32.mxu0 0.0
    %218 = vmatmul.mubr.f32.gmra.mrb[0].mxu0 %v129
    %v219 = vpop.f32.mrb[0].mxu0
    %v220 = vadd.f32 %v151, %v219
    %v221 = vpop.f32.mrb[0].mxu0
    %222 = vdwg.mxu0
    %v223 = vtanh.pop %v220
    %v224 = vld [vmem:[%s5] sm:$0x1]
    %v225 = vld [vmem:[#allocation2] sm:$0x1]
    %v227 = vlaneseq
    %v228 = vshrl.u32 %v227, 7
    %v229 = vsub.s32 0, %v228
    %v230 = vrot.slane %v224, %v229
    %v232 = vmul.f32 %v223, %v230
    %233 = vadd.xlane.f32.xlu0 %v232
    %v234 = vpop.xlane.xlu0 %233
    %v236 = vlaneseq
    %v237 = vshrl.u32 %v236, 7
    %v238 = vsub.s32 0, %v237
    %v239 = vrot.slane %v225, %v238
    %v241 = vadd.f32 %v234, %v239
    %vm242 = vcmask 7168
    %243 = vst.msk [vmem:[%s7] sm:$0xff] %vm242, %v241
    // Predicated region
    $region34: #{tpu_custom_call.1} parent=1 // pred_check
      _
    $region35: #{tpu_custom_call.1} parent=1 // pred_check_branch
      %245 = sbr.rel (0) target = $region37
    $region36: #{tpu_custom_call.1} parent=1 // pred_region
      _
    $region37: #{tpu_custom_call.1} parent=1 // pred_fallthru
      _
    // Predicated region
    $region38: #{tpu_custom_call.1} parent=1 // pred_check
      _
    $region39: #{tpu_custom_call.1} parent=1 // pred_check_branch
      %247 = sbr.rel (0) target = $region41
    $region40: #{tpu_custom_call.1} parent=1 // pred_region
      _
    $region41: #{tpu_custom_call.1} parent=1 // pred_fallthru
      _
    %248 = vsyncpa [#allocation4], 1

</llo_original>
